<compile_context>
chip_gen: v7x
topology: tpu7x:2x2x1
jax: 0.10.0
libtpu: 0.0.40
codegen_flags: <defaults>
</compile_context>

<pallas_src>
import numpy as np
import jax
import jax.numpy as jnp
from jax import lax
from jax.experimental import pallas as pl
from jax.experimental.pallas import tpu as pltpu


# -----------------------------------------------------------------------------
# Kernel: build the im2col tile in VMEM with static contiguous slices, then do
# exactly one MXU matmul  X[OH*N, K_PAD] @ BigW[K_PAD, OW*OC].
# -----------------------------------------------------------------------------
def _make_conv_kernel(n_batch, oh, row_stride, k_pad):
    def kernel(x_ref, w_ref, o_ref, xcol_ref):
        # x_ref:    [N, XW]          row-flattened zero-padded input (bf16, VMEM)
        # w_ref:    [K_PAD, OW*OC]   structured conv weight          (bf16, VMEM)
        # o_ref:    [OH*N, OW*OC]    f32 output, lane-dense (OW*OC = 512)
        # xcol_ref: [OH*N, K_PAD]    bf16 scratch patch matrix
        for oy in range(oh):  # static unroll (OH = 8): contiguous lane-window reads
            start = oy * row_stride
            xcol_ref[pl.ds(oy * n_batch, n_batch), :] = x_ref[:, pl.ds(start, k_pad)]
        o_ref[...] = jnp.dot(
            xcol_ref[...], w_ref[...], preferred_element_type=jnp.float32
        ).astype(o_ref.dtype)

    return kernel


# -----------------------------------------------------------------------------
# Static geometry (pure Python, computed once).
# -----------------------------------------------------------------------------
def _geometry(n, c, h, w, kh, kw, sh, sw, ph, pw):
    hp, wp = h + 2 * ph, w + 2 * pw
    oh = (hp - kh) // sh + 1
    ow = (wp - kw) // sw + 1
    row_elems = wp * c                       # elements per padded input row
    k_real = kh * row_elems                  # K = KH full rows (channels innermost)
    k_pad = ((k_real + 7) // 8) * 8          # sublane multiple (160 here, not 256)
    row_stride = sh * row_elems              # flat offset between output rows
    xw = max((oh - 1) * row_stride + k_pad, hp * wp * c)
    xw = ((xw + 127) // 128) * 128           # lane-dense flat input width
    return dict(hp=hp, wp=wp, oh=oh, ow=ow, k_real=k_real, k_pad=k_pad,
                row_stride=row_stride, xw=xw)


# -----------------------------------------------------------------------------
# One-time weight prep: BigW[(kh*WP + w)*C + ci, ox*OC + oc]
#   = W[oc, ci, kh, w - sw*ox]  if 0 <= w - sw*ox < KW else 0
# (stride-2 window selection folded into a zero-embedded weight matrix).
# -----------------------------------------------------------------------------
def _prepare_big_w(weight_oihw, geom, sw, compute_dtype):
    oc, c, kh, kw = weight_oihw.shape
    wp, ow = geom["wp"], geom["ow"]
    k_real, k_pad = geom["k_real"], geom["k_pad"]

    sel = np.zeros((wp, ow, kw), dtype=np.float32)
    for oxi in range(ow):
        for kwi in range(kw):
            sel[sw * oxi + kwi, oxi, kwi] = 1.0

    big_w = jnp.einsum("wxk,ochk->hwcxo", jnp.asarray(sel), weight_oihw)
    big_w = big_w.reshape(k_real, ow * oc)
    big_w = jnp.pad(big_w, ((0, k_pad - k_real), (0, 0)))   # zero rows >= k_real
    return big_w.astype(compute_dtype)


# -----------------------------------------------------------------------------
# Forward (traced under jit): light input prep + one pallas_call.
# -----------------------------------------------------------------------------
def _conv1_apply(x_nchw, big_w, geom, *, ph, pw, oc, compute_dtype, out_dtype):
    n, c, h, w = x_nchw.shape
    hp, wp, xw = geom["hp"], geom["wp"], geom["xw"]
    oh, ow, k_pad = geom["oh"], geom["ow"], geom["k_pad"]
    m_rows = oh * n

    # Tiny input prep (~4 KB): NCHW -> padded NHWC -> row-flat, lane-dense, bf16.
    x_nhwc = jnp.transpose(x_nchw, (0, 2, 3, 1))
    xp = jnp.pad(x_nhwc, ((0, 0), (ph, ph), (pw, pw), (0, 0)))
    xflat = xp.reshape(n, hp * wp * c)
    xflat = jnp.pad(xflat, ((0, 0), (0, xw - hp * wp * c))).astype(compute_dtype)

    kernel = _make_conv_kernel(n, oh, geom["row_stride"], k_pad)

    out = pl.pallas_call(
        kernel,
        out_shape=jax.ShapeDtypeStruct((m_rows, ow * oc), out_dtype),
        grid_spec=pltpu.PrefetchScalarGridSpec(
            num_scalar_prefetch=0,
            grid=(1,),                                        # whole problem, one step
            in_specs=[
                pl.BlockSpec((n, xw), lambda i: (0, 0)),          # full padded input
                pl.BlockSpec((k_pad, ow * oc), lambda i: (0, 0)),  # full BigW (bf16)
            ],
            out_specs=pl.BlockSpec((m_rows, ow * oc), lambda i: (0, 0)),
            scratch_shapes=[pltpu.VMEM((m_rows, k_pad), compute_dtype)],
        ),
        compiler_params=pltpu.CompilerParams(
            dimension_semantics=("arbitrary",),
        ),
    )(xflat, big_w)

    # rows are (oy, n), cols are (ox, oc)  ->  NCHW (required by nn.Conv2d contract;
    # a fused downstream consumer could take the [OH*N, OW*OC] tile directly).
    out = out.reshape(oh, n, ow, oc)
    return jnp.transpose(out, (1, 3, 0, 2))


# -----------------------------------------------------------------------------
# Builder: precompute BigW once, return a jitted forward(x).
# -----------------------------------------------------------------------------
def make_resnet_conv1(weight_oihw, input_shape, *, stride=(2, 2), padding=(3, 3),
                      compute_dtype=jnp.bfloat16, out_dtype=jnp.float32):
    n, c, h, w = input_shape
    oc, c_w, kh, kw = weight_oihw.shape
    assert c == c_w, "channel mismatch"
    sh, sw = stride
    ph, pw = padding

    geom = _geometry(n, c, h, w, kh, kw, sh, sw, ph, pw)
    big_w = jax.block_until_ready(_prepare_big_w(weight_oihw, geom, sw, compute_dtype))

    jitted = jax.jit(
        lambda x, bw: _conv1_apply(
            x, bw, geom, ph=ph, pw=pw, oc=oc,
            compute_dtype=compute_dtype, out_dtype=out_dtype)
    )

    def forward(x_nchw):
        return jitted(x_nchw, big_w)

    return forward


if __name__ == "__main__":
    # Deterministic synthetic params / inputs (no checkpoint loading).
    key = jax.random.PRNGKey(0)
    kx, kw_key = jax.random.split(key)

    N, CIN, H, W = 2, 1, 16, 16          # ResNetConv1 default in_channels=1
    COUT, KH, KW = 64, 7, 7

    x = jax.random.normal(kx, (N, CIN, H, W), dtype=jnp.float32)
    fan_in = CIN * KH * KW               # Kaiming-style scale
    weight = jax.random.normal(kw_key, (COUT, CIN, KH, KW),
                               dtype=jnp.float32) * (2.0 / fan_in) ** 0.5

    forward = make_resnet_conv1(weight, (N, CIN, H, W))
    y = jax.block_until_ready(forward(x))
    assert y.shape == (N, COUT, H // 2, W // 2), y.shape

    # Strict check: reference with the same bf16 quantization of x / W
    # (kernel accumulates in f32, so this should match to f32-ordering noise).
    x_q = x.astype(jnp.bfloat16).astype(jnp.float32)
    w_q = weight.astype(jnp.bfloat16).astype(jnp.float32)
    y_ref_q = lax.conv_general_dilated(
        x_q, w_q, window_strides=(2, 2), padding=((3, 3), (3, 3)),
        dimension_numbers=("NCHW", "OIHW", "NCHW"))
    assert jnp.allclose(y, y_ref_q, rtol=1e-3, atol=1e-3), "mismatch vs bf16-quantized ref"

    # Loose check vs the full-f32 nn.Conv2d semantics (bf16 compute path).
    y_ref = lax.conv_general_dilated(
        x, weight, window_strides=(2, 2), padding=((3, 3), (3, 3)),
        dimension_numbers=("NCHW", "OIHW", "NCHW"))
    assert jnp.allclose(y, y_ref, rtol=5e-2, atol=5e-2), "mismatch vs f32 reference"

    print("KERNEL_OK")
</pallas_src>

<mosaic_0001>
module attributes {stable_mosaic.version = 11 : i64} {
  func.func @kernel(%arg0: i32, %arg1: memref<2x512xbf16, #tpu.memory_space<vmem>>, %arg2: memref<160x512xbf16, #tpu.memory_space<vmem>>, %arg3: memref<16x512xf32, #tpu.memory_space<vmem>>, %arg4: memref<16x160xbf16, #tpu.memory_space<vmem>>) attributes {dimension_semantics = [#tpu.dimension_semantics<arbitrary>], iteration_bounds = array<i64: 1>, scalar_prefetch = 0 : i64, scratch_operands = 1 : i64, tpu.core_type = #tpu.core_type<tc>, window_params = [{pipeline_mode = #tpu.pipeline_mode<synchronous>, transform_indices = @transform_0, window_bounds = array<i64: 2, 512>}, {pipeline_mode = #tpu.pipeline_mode<synchronous>, transform_indices = @transform_1, window_bounds = array<i64: 160, 512>}, {pipeline_mode = #tpu.pipeline_mode<synchronous>, transform_indices = @transform_2, window_bounds = array<i64: 16, 512>}]} {
    %c0 = arith.constant 0 : index
    %c0_0 = arith.constant 0 : index
    %0 = vector.load %arg1[%c0, %c0_0] : memref<2x512xbf16, #tpu.memory_space<vmem>>, vector<2x160xbf16>
    %c0_1 = arith.constant 0 : index
    %c0_2 = arith.constant 0 : index
    %1 = vector.load %arg4[%c0_1, %c0_2] : memref<16x160xbf16, #tpu.memory_space<vmem>>, vector<2x160xbf16>
    tpu.vector_store %arg4[%c0_1, %c0_2], %0 {strides = array<i32>} : memref<16x160xbf16, #tpu.memory_space<vmem>>, vector<2x160xbf16>,
    %c0_3 = arith.constant 0 : index
    %c44 = arith.constant 44 : index
    %2 = vector.load %arg1[%c0_3, %c44] : memref<2x512xbf16, #tpu.memory_space<vmem>>, vector<2x160xbf16>
    %c2 = arith.constant 2 : index
    %c0_4 = arith.constant 0 : index
    %3 = vector.load %arg4[%c2, %c0_4] : memref<16x160xbf16, #tpu.memory_space<vmem>>, vector<2x160xbf16>
    tpu.vector_store %arg4[%c2, %c0_4], %2 {strides = array<i32>} : memref<16x160xbf16, #tpu.memory_space<vmem>>, vector<2x160xbf16>,
    %c0_5 = arith.constant 0 : index
    %c88 = arith.constant 88 : index
    %4 = vector.load %arg1[%c0_5, %c88] : memref<2x512xbf16, #tpu.memory_space<vmem>>, vector<2x160xbf16>
    %c4 = arith.constant 4 : index
    %c0_6 = arith.constant 0 : index
    %5 = vector.load %arg4[%c4, %c0_6] : memref<16x160xbf16, #tpu.memory_space<vmem>>, vector<2x160xbf16>
    tpu.vector_store %arg4[%c4, %c0_6], %4 {strides = array<i32>} : memref<16x160xbf16, #tpu.memory_space<vmem>>, vector<2x160xbf16>,
    %c0_7 = arith.constant 0 : index
    %c132 = arith.constant 132 : index
    %6 = vector.load %arg1[%c0_7, %c132] : memref<2x512xbf16, #tpu.memory_space<vmem>>, vector<2x160xbf16>
    %c6 = arith.constant 6 : index
    %c0_8 = arith.constant 0 : index
    %7 = vector.load %arg4[%c6, %c0_8] : memref<16x160xbf16, #tpu.memory_space<vmem>>, vector<2x160xbf16>
    tpu.vector_store %arg4[%c6, %c0_8], %6 {strides = array<i32>} : memref<16x160xbf16, #tpu.memory_space<vmem>>, vector<2x160xbf16>,
    %c0_9 = arith.constant 0 : index
    %c176 = arith.constant 176 : index
    %8 = vector.load %arg1[%c0_9, %c176] : memref<2x512xbf16, #tpu.memory_space<vmem>>, vector<2x160xbf16>
    %c8 = arith.constant 8 : index
    %c0_10 = arith.constant 0 : index
    %9 = vector.load %arg4[%c8, %c0_10] : memref<16x160xbf16, #tpu.memory_space<vmem>>, vector<2x160xbf16>
    tpu.vector_store %arg4[%c8, %c0_10], %8 {strides = array<i32>} : memref<16x160xbf16, #tpu.memory_space<vmem>>, vector<2x160xbf16>,
    %c0_11 = arith.constant 0 : index
    %c220 = arith.constant 220 : index
    %10 = vector.load %arg1[%c0_11, %c220] : memref<2x512xbf16, #tpu.memory_space<vmem>>, vector<2x160xbf16>
    %c10 = arith.constant 10 : index
    %c0_12 = arith.constant 0 : index
    %11 = vector.load %arg4[%c10, %c0_12] : memref<16x160xbf16, #tpu.memory_space<vmem>>, vector<2x160xbf16>
    tpu.vector_store %arg4[%c10, %c0_12], %10 {strides = array<i32>} : memref<16x160xbf16, #tpu.memory_space<vmem>>, vector<2x160xbf16>,
    %c0_13 = arith.constant 0 : index
    %c264 = arith.constant 264 : index
    %12 = vector.load %arg1[%c0_13, %c264] : memref<2x512xbf16, #tpu.memory_space<vmem>>, vector<2x160xbf16>
    %c12 = arith.constant 12 : index
    %c0_14 = arith.constant 0 : index
    %13 = vector.load %arg4[%c12, %c0_14] : memref<16x160xbf16, #tpu.memory_space<vmem>>, vector<2x160xbf16>
    tpu.vector_store %arg4[%c12, %c0_14], %12 {strides = array<i32>} : memref<16x160xbf16, #tpu.memory_space<vmem>>, vector<2x160xbf16>,
    %c0_15 = arith.constant 0 : index
    %c308 = arith.constant 308 : index
    %14 = vector.load %arg1[%c0_15, %c308] : memref<2x512xbf16, #tpu.memory_space<vmem>>, vector<2x160xbf16>
    %c14 = arith.constant 14 : index
    %c0_16 = arith.constant 0 : index
    %15 = vector.load %arg4[%c14, %c0_16] : memref<16x160xbf16, #tpu.memory_space<vmem>>, vector<2x160xbf16>
    tpu.vector_store %arg4[%c14, %c0_16], %14 {strides = array<i32>} : memref<16x160xbf16, #tpu.memory_space<vmem>>, vector<2x160xbf16>,
    %c0_17 = arith.constant 0 : index
    %c0_18 = arith.constant 0 : index
    %16 = vector.load %arg4[%c0_17, %c0_18] : memref<16x160xbf16, #tpu.memory_space<vmem>>, vector<16x160xbf16>
    %c0_19 = arith.constant 0 : index
    %c0_20 = arith.constant 0 : index
    %17 = vector.load %arg2[%c0_19, %c0_20] : memref<160x512xbf16, #tpu.memory_space<vmem>>, vector<160x512xbf16>
    %cst = arith.constant dense<0.000000e+00> : vector<16x512xf32>
    %18 = tpu.matmul %16, %17, %cst {dimension_numbers = #tpu.dot_dimension_numbers<[1], [0], [0], [1], [0, 0, 1, 1], [], []>} : vector<16x160xbf16>, vector<160x512xbf16>, vector<16x512xf32> -> vector<16x512xf32>
    %c0_21 = arith.constant 0 : index
    %c0_22 = arith.constant 0 : index
    %19 = vector.load %arg3[%c0_21, %c0_22] : memref<16x512xf32, #tpu.memory_space<vmem>>, vector<16x512xf32>
    tpu.vector_store %arg3[%c0_21, %c0_22], %18 {strides = array<i32>} : memref<16x512xf32, #tpu.memory_space<vmem>>, vector<16x512xf32>,
    return
  }
  func.func @transform_0(%arg0: i32) -> (i32, i32) {
    %c0_i32 = arith.constant 0 : i32
    %c0_i32_0 = arith.constant 0 : i32
    %c0_i32_1 = arith.constant 0 : i32
    return %c0_i32, %c0_i32_0 : i32, i32
  }
  func.func @transform_1(%arg0: i32) -> (i32, i32) {
    %c0_i32 = arith.constant 0 : i32
    %c0_i32_0 = arith.constant 0 : i32
    %c0_i32_1 = arith.constant 0 : i32
    return %c0_i32, %c0_i32_0 : i32, i32
  }
  func.func @transform_2(%arg0: i32) -> (i32, i32) {
    %c0_i32 = arith.constant 0 : i32
    %c0_i32_0 = arith.constant 0 : i32
    %c0_i32_1 = arith.constant 0 : i32
    return %c0_i32, %c0_i32_0 : i32, i32
  }
}

</mosaic_0001>

<llo_original>
// kernel: _lambda_.1
$region0: #{_lambda_.1}
  #allocation0 [shape = 'u32[]', space=smem, size = 0x4, offset = 0x4, fixed_abs, tag = 'smem constant byte address 0x4 - core index']
  #allocation1 [shape = 'u32[144,128]{1,0:T(1,128)}', space=vmem, size = 0x12000, scoped, tag = 'internal scratch']
  #allocation2 [shape = 'bf16[16,160]{1,0:T(16,128)(2,1)}', space=vmem, size = 0x2000, scoped, tag = 'scratch operand']
  %s0 = inlined_call_operand.vmem [shape: bf16[2,512], index: 0, kind: input, shape index: {}]
  %s1 = inlined_call_operand.hbm [shape: bf16[160,512], index: 1, kind: input, shape index: {}]
  %s2 = inlined_call_operand.vmem [shape: f32[16,512], index: 2, kind: output, shape index: {}]
  %s3 = sld [smem:[#allocation0]]
  $region22: #{_lambda_.1} parent=0
    _
  %s5 = ssub.s32 1, %s3
  %s6 = scalar_select 0, %s5, %s3
  $region1: #{_lambda_.1} parent=0
    #allocation3 [shape = 'u8[163840]{0}', space=vmem, size = 0x28000, scoped, tag = 'input window, operand 1, single buffered']
    #allocation4 [shape = 's32[1]{0}', space=sflag, size = 0x4, scoped, tag = 'scoped memory for _lambda_.1']
    %7 = vsyncpa [#allocation4], 0
    // Predicated region
    $region2: #{_lambda_.1} parent=1 // pred_check
      _
    $region3: #{_lambda_.1} parent=1 // pred_check_branch
      %9 = sbr.rel (0) target = $region5
    $region4: #{_lambda_.1} parent=1 // pred_region
      _
    $region5: #{_lambda_.1} parent=1 // pred_fallthru
      _
    // Predicated region
    $region6: #{_lambda_.1} parent=1 // pred_check
      _
    $region7: #{_lambda_.1} parent=1 // pred_check_branch
      %11 = sbr.rel (0) target = $region9
    $region8: #{_lambda_.1} parent=1 // pred_region
      %s13 = ssub.s32 5120, 5120
      %14 = vsyncadd [#allocation4], %s13
      %s15 = sshll.u32 [#allocation3], 4
      %s16 = int_to_ptr.vmem [resolvable:$true] %s15
      %21 = dma.hbm_to_vmem [thread:$0]  %s1, 5120, %s16, [#allocation4], 256, 256, 16
    $region9: #{_lambda_.1} parent=1 // pred_fallthru
      _
    // Predicated region
    $region10: #{_lambda_.1} parent=1 // pred_check
      _
    $region11: #{_lambda_.1} parent=1 // pred_check_branch
      %23 = sbr.rel (0) target = $region13
    $region12: #{_lambda_.1} parent=1 // pred_region
      %24 = dma.done [#allocation4], 5120
    $region13: #{_lambda_.1} parent=1 // pred_fallthru
      _
    %v26 = vld [vmem:[%s0] sm:$0x3]
    %v29 = vunpack.c.l.s4 1966171168
    %v30 = vunpack.c.0.s8 %v29
    %v31 = vlaneseq
    %v32 = vshrl.u32 %v31, 7
    %v33 = vsub.s32 %v30, %v32
    %v34 = vrot.slane %v26, %v33
    %v35 = vcombine.high %v34, %v34
    %v37 = vunpack.c.l.s4 1966171168
    %v38 = vunpack.c.0.s8 %v37
    %v39 = vlaneseq
    %v40 = vshrl.u32 %v39, 7
    %v41 = vsub.s32 %v38, %v40
    %v42 = vrot.slane %v34, %v41
    %v44 = vunpack.c.l.s4 1966171168
    %v45 = vunpack.c.0.s8 %v44
    %v46 = vlaneseq
    %v47 = vshrl.u32 %v46, 7
    %v48 = vsub.s32 %v45, %v47
    %v49 = vrot.slane %v35, %v48
    %52 = vst [vmem:[#allocation2] sm:$0x1] %v42
    %vm53 = vcmask 253952
    %54 = vst.msk [vmem:[#allocation2 + $0x8] sm:$0x1] %vm53, %v49
    %v55 = vld [vmem:[%s0] sm:$0x3]
    %v57 = vcombine.low %v55, %v55
    %v59 = vunpack.c.l.s4 1966171168
    %v60 = vunpack.c.0.s8 %v59
    %v61 = vlaneseq
    %v62 = vshrl.u32 %v61, 7
    %v63 = vsub.s32 %v60, %v62
    %v64 = vrot.slane %v57, %v63
    %v65 = vcombine.high %v64, %v64
    %v67 = vunpack.c.l.s4 1966171168
    %v68 = vunpack.c.0.s8 %v67
    %v69 = vlaneseq
    %v70 = vshrl.u32 %v69, 7
    %v71 = vsub.s32 %v68, %v70
    %v72 = vrot.slane %v64, %v71
    %v74 = vunpack.c.l.s4 1966171168
    %v75 = vunpack.c.0.s8 %v74
    %v76 = vlaneseq
    %v77 = vshrl.u32 %v76, 7
    %v78 = vsub.s32 %v75, %v77
    %v79 = vrot.slane %v65, %v78
    %80 = vrot.lane.b32.xlu0 %v72, 84
    %v81 = vpop.permute.xlu0 %80
    %82 = vrot.lane.b32.xlu0 %v79, 84
    %v83 = vpop.permute.xlu0 %82
    %vm84 = vcmask 687104
    %v85 = vsel %vm84, %v81, %v83
    %88 = vst [vmem:[#allocation2] sm:$0x2] %v85
    %vm89 = vcmask 254977
    %90 = vst.msk [vmem:[#allocation2 + $0x8] sm:$0x2] %vm89, %v83
    %v91 = vld [vmem:[%s0] sm:$0x3]
    %v94 = vunpack.c.l.s4 1966171168
    %v95 = vunpack.c.0.s8 %v94
    %v96 = vlaneseq
    %v97 = vshrl.u32 %v96, 7
    %v98 = vsub.s32 %v95, %v97
    %v99 = vrot.slane %v91, %v98
    %v100 = vcombine.low %v99, %v99
    %v102 = vunpack.c.l.s4 1966171168
    %v103 = vunpack.c.0.s8 %v102
    %v104 = vlaneseq
    %v105 = vshrl.u32 %v104, 7
    %v106 = vsub.s32 %v103, %v105
    %v107 = vrot.slane %v100, %v106
    %v109 = vunpack.c.l.s4 1966171168
    %v110 = vunpack.c.0.s8 %v109
    %v111 = vlaneseq
    %v112 = vshrl.u32 %v111, 7
    %v113 = vsub.s32 %v110, %v112
    %v114 = vrot.slane %v99, %v113
    %115 = vrot.lane.b32.xlu0 %v107, 40
    %v116 = vpop.permute.xlu0 %115
    %117 = vrot.lane.b32.xlu0 %v114, 40
    %v118 = vpop.permute.xlu0 %117
    %vm119 = vcmask 326656
    %v120 = vsel %vm119, %v116, %v118
    %123 = vst [vmem:[#allocation2] sm:$0x4] %v120
    %vm124 = vcmask 256002
    %125 = vst.msk [vmem:[#allocation2 + $0x8] sm:$0x4] %vm124, %v118
    %v126 = vld [vmem:[%s0 + $0x1] sm:$0x3]
    %v128 = vcombine.low %v126, %v126
    %v130 = vunpack.c.l.s4 1966171168
    %v131 = vunpack.c.0.s8 %v130
    %v132 = vlaneseq
    %v133 = vshrl.u32 %v132, 7
    %v134 = vsub.s32 %v131, %v133
    %v135 = vrot.slane %v128, %v134
    %v136 = vcombine.low %v135, %v135
    %v138 = vunpack.c.l.s4 1966171168
    %v139 = vunpack.c.0.s8 %v138
    %v140 = vlaneseq
    %v141 = vshrl.u32 %v140, 7
    %v142 = vsub.s32 %v139, %v141
    %v143 = vrot.slane %v136, %v142
    %v145 = vunpack.c.l.s4 1966171168
    %v146 = vunpack.c.0.s8 %v145
    %v147 = vlaneseq
    %v148 = vshrl.u32 %v147, 7
    %v149 = vsub.s32 %v146, %v148
    %v150 = vrot.slane %v135, %v149
    %151 = vrot.lane.b32.xlu0 %v143, 124
    %v152 = vpop.permute.xlu0 %151
    %153 = vrot.lane.b32.xlu0 %v150, 124
    %v154 = vpop.permute.xlu0 %153
    %vm155 = vcmask 1014784
    %v156 = vsel %vm155, %v152, %v154
    %159 = vst [vmem:[#allocation2] sm:$0x8] %v156
    %vm160 = vcmask 257027
    %161 = vst.msk [vmem:[#allocation2 + $0x8] sm:$0x8] %vm160, %v154
    %v162 = vld [vmem:[%s0 + $0x1] sm:$0x3]
    %v165 = vunpack.c.l.s4 1966171168
    %v166 = vunpack.c.0.s8 %v165
    %v167 = vlaneseq
    %v168 = vshrl.u32 %v167, 7
    %v169 = vsub.s32 %v166, %v168
    %v170 = vrot.slane %v162, %v169
    %v171 = vcombine.high %v170, %v170
    %v173 = vunpack.c.l.s4 1966171168
    %v174 = vunpack.c.0.s8 %v173
    %v175 = vlaneseq
    %v176 = vshrl.u32 %v175, 7
    %v177 = vsub.s32 %v174, %v176
    %v178 = vrot.slane %v170, %v177
    %v180 = vunpack.c.l.s4 1966171168
    %v181 = vunpack.c.0.s8 %v180
    %v182 = vlaneseq
    %v183 = vshrl.u32 %v182, 7
    %v184 = vsub.s32 %v181, %v183
    %v185 = vrot.slane %v171, %v184
    %v186 = vcombine.low %v178, %v178
    %v187 = vcombine.low %v185, %v185
    %188 = vrot.lane.b32.xlu0 %v186, 80
    %v189 = vpop.permute.xlu0 %188
    %190 = vrot.lane.b32.xlu0 %v187, 80
    %v191 = vpop.permute.xlu0 %190
    %vm192 = vcmask 654336
    %v193 = vsel %vm192, %v189, %v191
    %196 = vst [vmem:[#allocation2] sm:$0x10] %v193
    %vm197 = vcmask 258052
    %198 = vst.msk [vmem:[#allocation2 + $0x8] sm:$0x10] %vm197, %v191
    %v199 = vld [vmem:[%s0 + $0x1] sm:$0x3]
    %v201 = vcombine.low %v199, %v199
    %v203 = vunpack.c.l.s4 1966171168
    %v204 = vunpack.c.0.s8 %v203
    %v205 = vlaneseq
    %v206 = vshrl.u32 %v205, 7
    %v207 = vsub.s32 %v204, %v206
    %v208 = vrot.slane %v201, %v207
    %v209 = vcombine.high %v208, %v208
    %v211 = vunpack.c.l.s4 1966171168
    %v212 = vunpack.c.0.s8 %v211
    %v213 = vlaneseq
    %v214 = vshrl.u32 %v213, 7
    %v215 = vsub.s32 %v212, %v214
    %v216 = vrot.slane %v208, %v215
    %v218 = vunpack.c.l.s4 1966171168
    %v219 = vunpack.c.0.s8 %v218
    %v220 = vlaneseq
    %v221 = vshrl.u32 %v220, 7
    %v222 = vsub.s32 %v219, %v221
    %v223 = vrot.slane %v209, %v222
    %v224 = vcombine.low %v216, %v216
    %v225 = vcombine.low %v223, %v223
    %226 = vrot.lane.b32.xlu0 %v224, 36
    %v227 = vpop.permute.xlu0 %226
    %228 = vrot.lane.b32.xlu0 %v225, 36
    %v229 = vpop.permute.xlu0 %228
    %vm230 = vcmask 293888
    %v231 = vsel %vm230, %v227, %v229
    %234 = vst [vmem:[#allocation2] sm:$0x20] %v231
    %vm235 = vcmask 259077
    %236 = vst.msk [vmem:[#allocation2 + $0x8] sm:$0x20] %vm235, %v229
    %v237 = vld [vmem:[%s0 + $0x2] sm:$0x3]
    %v240 = vunpack.c.l.s4 1966171168
    %v241 = vunpack.c.0.s8 %v240
    %v242 = vlaneseq
    %v243 = vshrl.u32 %v242, 7
    %v244 = vsub.s32 %v241, %v243
    %v245 = vrot.slane %v237, %v244
    %v246 = vcombine.low %v245, %v245
    %v248 = vunpack.c.l.s4 1966171168
    %v249 = vunpack.c.0.s8 %v248
    %v250 = vlaneseq
    %v251 = vshrl.u32 %v250, 7
    %v252 = vsub.s32 %v249, %v251
    %v253 = vrot.slane %v246, %v252
    %v255 = vunpack.c.l.s4 1966171168
    %v256 = vunpack.c.0.s8 %v255
    %v257 = vlaneseq
    %v258 = vshrl.u32 %v257, 7
    %v259 = vsub.s32 %v256, %v258
    %v260 = vrot.slane %v245, %v259
    %v261 = vcombine.low %v253, %v253
    %v262 = vcombine.low %v260, %v260
    %263 = vrot.lane.b32.xlu0 %v261, 120
    %v264 = vpop.permute.xlu0 %263
    %265 = vrot.lane.b32.xlu0 %v262, 120
    %v266 = vpop.permute.xlu0 %265
    %vm267 = vcmask 982016
    %v268 = vsel %vm267, %v264, %v266
    %271 = vst [vmem:[#allocation2] sm:$0x40] %v268
    %vm272 = vcmask 260102
    %273 = vst.msk [vmem:[#allocation2 + $0x8] sm:$0x40] %vm272, %v266
    %v274 = vld [vmem:[%s0 + $0x2] sm:$0x3]
    %v276 = vcombine.low %v274, %v274
    %v278 = vunpack.c.l.s4 1966171168
    %v279 = vunpack.c.0.s8 %v278
    %v280 = vlaneseq
    %v281 = vshrl.u32 %v280, 7
    %v282 = vsub.s32 %v279, %v281
    %v283 = vrot.slane %v276, %v282
    %v284 = vcombine.low %v283, %v283
    %v286 = vunpack.c.l.s4 1966171168
    %v287 = vunpack.c.0.s8 %v286
    %v288 = vlaneseq
    %v289 = vshrl.u32 %v288, 7
    %v290 = vsub.s32 %v287, %v289
    %v291 = vrot.slane %v284, %v290
    %v293 = vunpack.c.l.s4 1966171168
    %v294 = vunpack.c.0.s8 %v293
    %v295 = vlaneseq
    %v296 = vshrl.u32 %v295, 7
    %v297 = vsub.s32 %v294, %v296
    %v298 = vrot.slane %v283, %v297
    %v299 = vcombine.low %v291, %v291
    %v300 = vcombine.low %v298, %v298
    %301 = vrot.lane.b32.xlu0 %v299, 76
    %v302 = vpop.permute.xlu0 %301
    %303 = vrot.lane.b32.xlu0 %v300, 76
    %v304 = vpop.permute.xlu0 %303
    %vm305 = vcmask 621568
    %v306 = vsel %vm305, %v302, %v304
    %309 = vst [vmem:[#allocation2] sm:$0x80] %v306
    %vm310 = vcmask 261127
    %311 = vst.msk [vmem:[#allocation2 + $0x8] sm:$0x80] %vm310, %v304
    %v312 = vld [vmem:[#allocation2] sm:$0xff]
    %v313 = vld [vmem:[#allocation2 + $0x8] sm:$0xff]
    %v314 = vld [vmem:[#allocation3] sm:$0xff]
    %v315 = vld [vmem:[#allocation3 + $0x8] sm:$0xff]
    %v316 = vld [vmem:[#allocation3 + $0x10] sm:$0xff]
    %v317 = vld [vmem:[#allocation3 + $0x18] sm:$0xff]
    %v318 = vld [vmem:[#allocation3 + $0x20] sm:$0xff]
    %v319 = vld [vmem:[#allocation3 + $0x28] sm:$0xff]
    %v320 = vld [vmem:[#allocation3 + $0x30] sm:$0xff]
    %v321 = vld [vmem:[#allocation3 + $0x38] sm:$0xff]
    %v322 = vld [vmem:[#allocation3 + $0x40] sm:$0xff]
    %v323 = vld [vmem:[#allocation3 + $0x48] sm:$0xff]
    %v324 = vld [vmem:[#allocation3 + $0x50] sm:$0xff]
    %v325 = vld [vmem:[#allocation3 + $0x58] sm:$0xff]
    %v326 = vld [vmem:[#allocation3 + $0x60] sm:$0xff]
    %v327 = vld [vmem:[#allocation3 + $0x68] sm:$0xff]
    %v328 = vld [vmem:[#allocation3 + $0x70] sm:$0xff]
    %v329 = vld [vmem:[#allocation3 + $0x78] sm:$0xff]
    %v330 = vld [vmem:[#allocation3 + $0x80] sm:$0xff]
    %v331 = vld [vmem:[#allocation3 + $0x88] sm:$0xff]
    %v332 = vld [vmem:[#allocation3 + $0x90] sm:$0xff]
    %v333 = vld [vmem:[#allocation3 + $0x98] sm:$0xff]
    %v334 = vld [vmem:[#allocation3 + $0xa0] sm:$0xff]
    %v335 = vld [vmem:[#allocation3 + $0xa8] sm:$0xff]
    %v336 = vld [vmem:[#allocation3 + $0xb0] sm:$0xff]
    %v337 = vld [vmem:[#allocation3 + $0xb8] sm:$0xff]
    %v338 = vld [vmem:[#allocation3 + $0xc0] sm:$0xff]
    %v339 = vld [vmem:[#allocation3 + $0xc8] sm:$0xff]
    %v340 = vld [vmem:[#allocation3 + $0xd0] sm:$0xff]
    %v341 = vld [vmem:[#allocation3 + $0xd8] sm:$0xff]
    %v342 = vld [vmem:[#allocation3 + $0xe0] sm:$0xff]
    %v343 = vld [vmem:[#allocation3 + $0xe8] sm:$0xff]
    %v344 = vld [vmem:[#allocation3 + $0xf0] sm:$0xff]
    %v345 = vld [vmem:[#allocation3 + $0xf8] sm:$0xff]
    %v346 = vld [vmem:[#allocation3 + $0x100] sm:$0xff]
    %v347 = vld [vmem:[#allocation3 + $0x108] sm:$0xff]
    %v348 = vld [vmem:[#allocation3 + $0x110] sm:$0xff]
    %v349 = vld [vmem:[#allocation3 + $0x118] sm:$0xff]
    %v350 = vld [vmem:[#allocation3 + $0x120] sm:$0xff]
    %v351 = vld [vmem:[#allocation3 + $0x128] sm:$0xff]
    %v352 = vld [vmem:[#allocation3 + $0x130] sm:$0xff]
    %v353 = vld [vmem:[#allocation3 + $0x138] sm:$0xff]
    %v394 = vunpack.c.l.b16 %v314
    %v395 = vunpack.c.h.b16 %v314
    %v396 = vunpack.c.l.b16 %v315
    %v397 = vunpack.c.h.b16 %v315
    %v398 = vunpack.c.l.b16 %v316
    %v399 = vunpack.c.h.b16 %v316
    %v400 = vunpack.c.l.b16 %v317
    %v401 = vunpack.c.h.b16 %v317
    %v402 = vunpack.c.l.b16 %v318
    %v403 = vunpack.c.h.b16 %v318
    %v404 = vunpack.c.l.b16 %v319
    %v405 = vunpack.c.h.b16 %v319
    %v406 = vunpack.c.l.b16 %v320
    %v407 = vunpack.c.h.b16 %v320
    %v408 = vunpack.c.l.b16 %v321
    %v409 = vunpack.c.h.b16 %v321
    %v410 = vunpack.c.l.b16 %v322
    %v411 = vunpack.c.h.b16 %v322
    %v412 = vunpack.c.l.b16 %v323
    %v413 = vunpack.c.h.b16 %v323
    %v414 = vunpack.c.l.b16 %v324
    %v415 = vunpack.c.h.b16 %v324
    %v416 = vunpack.c.l.b16 %v325
    %v417 = vunpack.c.h.b16 %v325
    %v418 = vunpack.c.l.b16 %v326
    %v419 = vunpack.c.h.b16 %v326
    %v420 = vunpack.c.l.b16 %v327
    %v421 = vunpack.c.h.b16 %v327
    %v422 = vunpack.c.l.b16 %v328
    %v423 = vunpack.c.h.b16 %v328
    %v424 = vunpack.c.l.b16 %v329
    %v425 = vunpack.c.h.b16 %v329
    %v426 = vunpack.c.l.b16 %v330
    %v427 = vunpack.c.h.b16 %v330
    %v428 = vunpack.c.l.b16 %v331
    %v429 = vunpack.c.h.b16 %v331
    %v430 = vunpack.c.l.b16 %v332
    %v431 = vunpack.c.h.b16 %v332
    %v432 = vunpack.c.l.b16 %v333
    %v433 = vunpack.c.h.b16 %v333
    %v434 = vunpack.c.l.b16 %v334
    %v435 = vunpack.c.h.b16 %v334
    %v436 = vunpack.c.l.b16 %v335
    %v437 = vunpack.c.h.b16 %v335
    %v438 = vunpack.c.l.b16 %v336
    %v439 = vunpack.c.h.b16 %v336
    %v440 = vunpack.c.l.b16 %v337
    %v441 = vunpack.c.h.b16 %v337
    %v442 = vunpack.c.l.b16 %v338
    %v443 = vunpack.c.h.b16 %v338
    %v444 = vunpack.c.l.b16 %v339
    %v445 = vunpack.c.h.b16 %v339
    %v446 = vunpack.c.l.b16 %v340
    %v447 = vunpack.c.h.b16 %v340
    %v448 = vunpack.c.l.b16 %v341
    %v449 = vunpack.c.h.b16 %v341
    %v450 = vunpack.c.l.b16 %v342
    %v451 = vunpack.c.h.b16 %v342
    %v452 = vunpack.c.l.b16 %v343
    %v453 = vunpack.c.h.b16 %v343
    %v454 = vunpack.c.l.b16 %v344
    %v455 = vunpack.c.h.b16 %v344
    %v456 = vunpack.c.l.b16 %v345
    %v457 = vunpack.c.h.b16 %v345
    %v458 = vunpack.c.l.b16 %v346
    %v459 = vunpack.c.h.b16 %v346
    %v460 = vunpack.c.l.b16 %v347
    %v461 = vunpack.c.h.b16 %v347
    %v462 = vunpack.c.l.b16 %v348
    %v463 = vunpack.c.h.b16 %v348
    %v464 = vunpack.c.l.b16 %v349
    %v465 = vunpack.c.h.b16 %v349
    %v466 = vunpack.c.l.b16 %v350
    %v467 = vunpack.c.h.b16 %v350
    %v468 = vunpack.c.l.b16 %v351
    %v469 = vunpack.c.h.b16 %v351
    %v470 = vunpack.c.l.b16 %v352
    %v471 = vunpack.c.h.b16 %v352
    %v472 = vunpack.c.l.b16 %v353
    %v473 = vunpack.c.h.b16 %v353
    %v474 = vpack.c.b16 %v398, %v394
    %v475 = vpack.c.b16 %v399, %v395
    %v476 = vpack.c.b16 %v400, %v396
    %v477 = vpack.c.b16 %v401, %v397
    %v478 = vpack.c.b16 %v406, %v402
    %v479 = vpack.c.b16 %v407, %v403
    %v480 = vpack.c.b16 %v408, %v404
    %v481 = vpack.c.b16 %v409, %v405
    %v482 = vpack.c.b16 %v414, %v410
    %v483 = vpack.c.b16 %v415, %v411
    %v484 = vpack.c.b16 %v416, %v412
    %v485 = vpack.c.b16 %v417, %v413
    %v486 = vpack.c.b16 %v422, %v418
    %v487 = vpack.c.b16 %v423, %v419
    %v488 = vpack.c.b16 %v424, %v420
    %v489 = vpack.c.b16 %v425, %v421
    %v490 = vpack.c.b16 %v430, %v426
    %v491 = vpack.c.b16 %v431, %v427
    %v492 = vpack.c.b16 %v432, %v428
    %v493 = vpack.c.b16 %v433, %v429
    %v494 = vpack.c.b16 %v438, %v434
    %v495 = vpack.c.b16 %v439, %v435
    %v496 = vpack.c.b16 %v440, %v436
    %v497 = vpack.c.b16 %v441, %v437
    %v498 = vpack.c.b16 %v446, %v442
    %v499 = vpack.c.b16 %v447, %v443
    %v500 = vpack.c.b16 %v448, %v444
    %v501 = vpack.c.b16 %v449, %v445
    %v502 = vpack.c.b16 %v454, %v450
    %v503 = vpack.c.b16 %v455, %v451
    %v504 = vpack.c.b16 %v456, %v452
    %v505 = vpack.c.b16 %v457, %v453
    %v506 = vpack.c.b16 %v462, %v458
    %v507 = vpack.c.b16 %v463, %v459
    %v508 = vpack.c.b16 %v464, %v460
    %v509 = vpack.c.b16 %v465, %v461
    %v510 = vpack.c.b16 %v470, %v466
    %v511 = vpack.c.b16 %v471, %v467
    %v512 = vpack.c.b16 %v472, %v468
    %v513 = vpack.c.b16 %v473, %v469
    %vm554 = vcmask 261120
    %v556 = vsel %vm554, %v313, 0
    %558 = vmatprep.subr.bf16.mxu0 %v475
    %559 = vmatpush1.bf16.msra.mxu0 %v474
    %560 = vmatprep.subr.bf16.mxu0 %v479
    %561 = vmatpush1.bf16.msra.mxu0 %v478
    %562 = vmatprep.subr.bf16.mxu0 %v483
    %563 = vmatpush1.bf16.msra.mxu0 %v482
    %564 = vmatprep.subr.bf16.mxu0 %v487
    %565 = vmatpush1.bf16.msra.mxu0 %v486
    %566 = vmatprep.subr.bf16.mxu0 %v491
    %567 = vmatpush1.bf16.msra.mxu0 %v490
    %568 = vmatprep.subr.bf16.mxu0 %v495
    %569 = vmatpush1.bf16.msra.mxu0 %v494
    %570 = vmatprep.subr.bf16.mxu0 %v499
    %571 = vmatpush1.bf16.msra.mxu0 %v498
    %572 = vmatprep.subr.bf16.mxu0 %v503
    %573 = vmatpush1.bf16.msra.mxu0 %v502
    %574 = vmatprep.subr.bf16.mxu0 %v507
    %575 = vmatpush1.bf16.msra.mxu0 %v506
    %576 = vmatprep.subr.bf16.mxu0 %v511
    %577 = vmatpush1.bf16.msra.mxu0 %v510
    %578 = vmatprep.subr.bf16.mxu0 0
    %579 = vmatpush1.bf16.msra.mxu0 0
    %580 = vmatprep.subr.bf16.mxu0 0
    %581 = vmatpush1.bf16.msra.mxu0 0
    %582 = vmatprep.subr.bf16.mxu0 0
    %583 = vmatpush1.bf16.msra.mxu0 0
    %584 = vmatprep.subr.bf16.mxu0 0
    %585 = vmatpush1.bf16.msra.mxu0 0
    %586 = vmatprep.subr.bf16.mxu0 0
    %587 = vmatpush1.bf16.msra.mxu0 0
    %588 = vmatprep.subr.bf16.mxu0 0
    %589 = vmatpush1.bf16.msra.mxu0 0
    %590 = vmatprep.mubr.bf16.mxu0 %v556
    %591 = vmatmul.mubr.bf16.gmra.mrb[0].mxu0 %v312
    %v592 = vpop.f32.mrb[0].mxu0
    %v593 = vadd.f32 0.0, %v592
    %v594 = vpop.f32.mrb[0].mxu0
    %v595 = vadd.f32 0.0, %v594
    %v596 = vpop.f32.mrb[0].mxu0
    %v597 = vadd.f32 0.0, %v596
    %v598 = vpop.f32.mrb[0].mxu0
    %v599 = vadd.f32 0.0, %v598
    %600 = vdwg.mxu0
    %601 = vmatprep.subr.bf16.mxu0 %v477
    %602 = vmatpush1.bf16.msra.mxu0 %v476
    %603 = vmatprep.subr.bf16.mxu0 %v481
    %604 = vmatpush1.bf16.msra.mxu0 %v480
    %605 = vmatprep.subr.bf16.mxu0 %v485
    %606 = vmatpush1.bf16.msra.mxu0 %v484
    %607 = vmatprep.subr.bf16.mxu0 %v489
    %608 = vmatpush1.bf16.msra.mxu0 %v488
    %609 = vmatprep.subr.bf16.mxu0 %v493
    %610 = vmatpush1.bf16.msra.mxu0 %v492
    %611 = vmatprep.subr.bf16.mxu0 %v497
    %612 = vmatpush1.bf16.msra.mxu0 %v496
    %613 = vmatprep.subr.bf16.mxu0 %v501
    %614 = vmatpush1.bf16.msra.mxu0 %v500
    %615 = vmatprep.subr.bf16.mxu0 %v505
    %616 = vmatpush1.bf16.msra.mxu0 %v504
    %617 = vmatprep.subr.bf16.mxu0 %v509
    %618 = vmatpush1.bf16.msra.mxu0 %v508
    %619 = vmatprep.subr.bf16.mxu0 %v513
    %620 = vmatpush1.bf16.msra.mxu0 %v512
    %621 = vmatprep.subr.bf16.mxu0 0
    %622 = vmatpush1.bf16.msra.mxu0 0
    %623 = vmatprep.subr.bf16.mxu0 0
    %624 = vmatpush1.bf16.msra.mxu0 0
    %625 = vmatprep.subr.bf16.mxu0 0
    %626 = vmatpush1.bf16.msra.mxu0 0
    %627 = vmatprep.subr.bf16.mxu0 0
    %628 = vmatpush1.bf16.msra.mxu0 0
    %629 = vmatprep.subr.bf16.mxu0 0
    %630 = vmatpush1.bf16.msra.mxu0 0
    %631 = vmatprep.subr.bf16.mxu0 0
    %632 = vmatpush1.bf16.msra.mxu0 0
    %633 = vmatprep.mubr.bf16.mxu0 %v556
    %634 = vmatmul.mubr.bf16.gmra.mrb[0].mxu0 %v312
    %v635 = vpop.f32.mrb[0].mxu0
    %v636 = vadd.f32 0.0, %v635
    %v637 = vpop.f32.mrb[0].mxu0
    %v638 = vadd.f32 0.0, %v637
    %v639 = vpop.f32.mrb[0].mxu0
    %v640 = vadd.f32 0.0, %v639
    %v641 = vpop.f32.mrb[0].mxu0
    %v642 = vadd.f32 0.0, %v641
    %643 = vdwg.mxu0
    %644 = vst [vmem:[%s2] sm:$0xff] %v593
    %645 = vst [vmem:[%s2 + $0x8] sm:$0xff] %v595
    %646 = vst [vmem:[%s2 + $0x10] sm:$0xff] %v636
    %647 = vst [vmem:[%s2 + $0x18] sm:$0xff] %v638
    %648 = vst [vmem:[%s2 + $0x20] sm:$0xff] %v597
    %649 = vst [vmem:[%s2 + $0x28] sm:$0xff] %v599
    %650 = vst [vmem:[%s2 + $0x30] sm:$0xff] %v640
    %651 = vst [vmem:[%s2 + $0x38] sm:$0xff] %v642
    // Predicated region
    $region14: #{_lambda_.1} parent=1 // pred_check
      _
    $region15: #{_lambda_.1} parent=1 // pred_check_branch
      %653 = sbr.rel (0) target = $region17
    $region16: #{_lambda_.1} parent=1 // pred_region
      _
    $region17: #{_lambda_.1} parent=1 // pred_fallthru
      _
    // Predicated region
    $region18: #{_lambda_.1} parent=1 // pred_check
      _
    $region19: #{_lambda_.1} parent=1 // pred_check_branch
      %655 = sbr.rel (0) target = $region21
    $region20: #{_lambda_.1} parent=1 // pred_region
      _
    $region21: #{_lambda_.1} parent=1 // pred_fallthru
      _
    %656 = vsyncpa [#allocation4], 1

</llo_original>
